<compile_context>
chip_gen: v5e
topology: v5e:2x2
jax: 0.10.0
libtpu: 0.0.40
codegen_flags: <defaults>
</compile_context>

<pallas_src>
import functools

import jax
import jax.numpy as jnp
from jax.experimental import pallas as pl
from jax.experimental.pallas import tpu as pltpu

LN_EPS = 1e-5
NEG_SLOPE = 0.1
LANE = 128
SUBLANE = 8


def _round_up(x, m):
    return ((x + m - 1) // m) * m


def _leaky_relu(x):
    return jnp.where(x >= 0, x, NEG_SLOPE * x)


def _tpu_vmem_bytes():
    """Physical VMEM per TensorCore; conservative (v7x, 64 MiB) fallback."""
    try:
        info = pltpu.get_tpu_info()
        cap = getattr(info, "vmem_capacity_bytes", None)
        if cap:
            return int(cap)
    except Exception:
        pass
    return 64 * 1024 * 1024


# --------------------------------------------------------------------------
# Kernel
# --------------------------------------------------------------------------
def mlp_kernel(x_ref, g_ref, beta_ref,
               w1_ref, b1_ref, w2_ref, b2_ref, w3_ref, b3_ref,
               o_ref, *, inv_d):
    # ---- LayerNorm over the true input_dim, f32, single pass ----
    # Padded feature lanes of x (if any) are zero, so sums stay exact.
    x = x_ref[...].astype(jnp.float32)                 # (TB, dp)
    sx = jnp.sum(x, axis=-1, keepdims=True)
    sxx = jnp.sum(x * x, axis=-1, keepdims=True)
    mean = sx * inv_d
    var = jnp.maximum(sxx * inv_d - mean * mean, 0.0)
    xn = (x - mean) * jax.lax.rsqrt(var + LN_EPS)
    xn = xn * g_ref[...] + beta_ref[...]               # padded gamma/beta == 0

    # ---- fc1/fc2/fc3 + LeakyReLU: bf16 MXU operands, f32 accumulation ----
    h = jnp.dot(xn.astype(jnp.bfloat16), w1_ref[...],
                preferred_element_type=jnp.float32) + b1_ref[...]
    h = _leaky_relu(h)
    h = jnp.dot(h.astype(jnp.bfloat16), w2_ref[...],
                preferred_element_type=jnp.float32) + b2_ref[...]
    h = _leaky_relu(h)
    h = jnp.dot(h.astype(jnp.bfloat16), w3_ref[...],
                preferred_element_type=jnp.float32) + b3_ref[...]
    h = _leaky_relu(h)

    o_ref[...] = h.astype(o_ref.dtype)


# --------------------------------------------------------------------------
# Parameter packing (do once, outside the forward)
# --------------------------------------------------------------------------
def prepare_params(params):
    """Pad feature dims to lane multiples and cast matmul weights to bf16."""
    D, H = params["w1"].shape
    dp = _round_up(D, LANE)
    hp = _round_up(H, LANE)

    def pad2(a, r, c):
        a = a.reshape((-1, a.shape[-1]))
        return jnp.pad(a, ((0, r - a.shape[0]), (0, c - a.shape[1])))

    packed = {
        "g":  pad2(params["ln_g"].astype(jnp.float32), 1, dp),
        "bt": pad2(params["ln_b"].astype(jnp.float32), 1, dp),
        "w1": pad2(params["w1"], dp, hp).astype(jnp.bfloat16),
        "b1": pad2(params["b1"].astype(jnp.float32), 1, hp),
        "w2": pad2(params["w2"], hp, hp).astype(jnp.bfloat16),
        "b2": pad2(params["b2"].astype(jnp.float32), 1, hp),
        "w3": pad2(params["w3"], hp, hp).astype(jnp.bfloat16),
        "b3": pad2(params["b3"].astype(jnp.float32), 1, hp),
    }
    return packed, (D, H)


# --------------------------------------------------------------------------
# Tiling / VMEM arithmetic
# --------------------------------------------------------------------------
def _act_bytes_per_row(dp, hp):
    return (2 * dp * 4          # double-buffered x tile (f32)
            + 2 * hp * 4        # double-buffered out tile (f32)
            + (dp + 2 * hp) * 4  # live f32 intermediates (xn, h)
            + (dp + 2 * hp) * 2)  # bf16 matmul-operand temporaries


def _pick_block_b(batch, dp, hp, resident_bytes, budget):
    block_b = SUBLANE
    per_row = _act_bytes_per_row(dp, hp)
    for cand in (4096, 2048, 1024, 512, 256, 128, 64, 32, 16, 8):
        if cand * per_row + resident_bytes <= budget:
            block_b = cand
            break
    block_b = min(block_b, _round_up(batch, SUBLANE))
    # For large batches keep >= 2 grid steps (256-aligned tiles) so the
    # "parallel" batch axis can be sharded across v7x's two TensorCores;
    # on single-TC chips the extra grid step costs ~0.35 us (negligible).
    if batch >= 512:
        half = max(256, ((batch // 2) // 256) * 256)
        block_b = min(block_b, half)
    return block_b


# --------------------------------------------------------------------------
# Forward
# --------------------------------------------------------------------------
@functools.partial(
    jax.jit,
    static_argnames=("input_dim", "hidden_size", "block_b", "resident_weights"))
def _mlp_forward_impl(x, packed, *, input_dim, hidden_size, block_b,
                      resident_weights):
    B, D = x.shape
    assert D == input_dim
    dp, hp = packed["w1"].shape

    vmem_cap = _tpu_vmem_bytes()
    budget = (vmem_cap * 3) // 4          # ~48 MiB on v7x, ~96 MiB on v5e/v6e

    weight_copies = 1 if resident_weights else 2   # blocked path double-buffers
    resident_bytes = weight_copies * ((dp * hp + 2 * hp * hp) * 2   # bf16 weights
                                      + (2 * dp + 3 * hp) * 4)      # f32 ln + biases
    # TODO(synk): for very large hidden sizes where the resident weights exceed
    # the VMEM budget, stream w2/w3 over a K-tiled grid axis (emit_pipeline)
    # instead of keeping them whole-array resident.

    if block_b is None:
        block_b = _pick_block_b(B, dp, hp, resident_bytes, budget)
    assert block_b % SUBLANE == 0

    # Feature padding only when input_dim is not a lane multiple (zero padding
    # keeps the LayerNorm statistics and matmuls exact). The batch dimension is
    # handled by a cdiv grid with a masked partial last block -> no batch
    # pad / slice HBM passes.
    x_in = jnp.pad(x, ((0, 0), (0, dp - D))) if dp != D else x

    grid = (pl.cdiv(B, block_b),)

    # Compiler VMEM limit consistent with the tiling decision (+ margin for
    # internal scratch), clamped below physical capacity.
    vmem_limit = resident_bytes + block_b * _act_bytes_per_row(dp, hp) + (16 << 20)
    vmem_limit = int(max(32 << 20, min(vmem_limit, vmem_cap - (4 << 20))))

    if resident_weights:
        # Single resident VMEM copy of each parameter (no pipelining, no
        # double-buffering).
        param_spec = lambda shape: pl.BlockSpec(memory_space=pltpu.MemorySpace.VMEM)
    else:
        # Fallback: constant-index blocked specs (pipeliner double-buffers).
        param_spec = lambda shape: pl.BlockSpec(shape, lambda i: (0, 0))

    out = pl.pallas_call(
        functools.partial(mlp_kernel, inv_d=1.0 / input_dim),
        out_shape=jax.ShapeDtypeStruct((B, hp), x.dtype),
        grid_spec=pltpu.PrefetchScalarGridSpec(
            num_scalar_prefetch=0,
            grid=grid,
            in_specs=[
                pl.BlockSpec((block_b, dp), lambda i: (i, 0)),  # x tile (pipelined)
                param_spec((1, dp)),    # ln gamma
                param_spec((1, dp)),    # ln beta
                param_spec((dp, hp)),   # w1
                param_spec((1, hp)),    # b1
                param_spec((hp, hp)),   # w2
                param_spec((1, hp)),    # b2
                param_spec((hp, hp)),   # w3
                param_spec((1, hp)),    # b3
            ],
            out_specs=pl.BlockSpec((block_b, hp), lambda i: (i, 0)),
        ),
        compiler_params=pltpu.CompilerParams(
            dimension_semantics=("parallel",),
            vmem_limit_bytes=vmem_limit,
        ),
    )(x_in, packed["g"], packed["bt"],
      packed["w1"], packed["b1"], packed["w2"], packed["b2"],
      packed["w3"], packed["b3"])

    if hp != hidden_size:
        out = out[:, :hidden_size]
    return out


def mlp_forward(x, prepared, block_b=None):
    packed, (input_dim, hidden_size) = prepared
    try:
        return _mlp_forward_impl(x, packed, input_dim=input_dim,
                                 hidden_size=hidden_size, block_b=block_b,
                                 resident_weights=True)
    except Exception:
        # Safety net: if the whole-array resident-VMEM specs fail to lower on
        # this backend, fall back to blocked (double-buffered) weight specs.
        return _mlp_forward_impl(x, packed, input_dim=input_dim,
                                 hidden_size=hidden_size, block_b=block_b,
                                 resident_weights=False)


# --------------------------------------------------------------------------
# Init + pure-JAX reference
# --------------------------------------------------------------------------
def init_params(key, input_dim, hidden_size, dtype=jnp.float32):
    """Deterministic init mirroring the PyTorch module's parameter shapes."""
    ks = jax.random.split(key, 6)

    def linear(kw, kb, fan_in, fan_out):
        bound = 1.0 / jnp.sqrt(fan_in)
        # stored transposed: (in, out)
        w = jax.random.uniform(kw, (fan_in, fan_out), dtype, -bound, bound)
        b = jax.random.uniform(kb, (1, fan_out), dtype, -bound, bound)
        return w, b

    w1, b1 = linear(ks[0], ks[1], input_dim, hidden_size)
    w2, b2 = linear(ks[2], ks[3], hidden_size, hidden_size)
    w3, b3 = linear(ks[4], ks[5], hidden_size, hidden_size)

    return {
        "ln_g": jnp.ones((1, input_dim), dtype),
        "ln_b": jnp.zeros((1, input_dim), dtype),
        "w1": w1, "b1": b1,
        "w2": w2, "b2": b2,
        "w3": w3, "b3": b3,
    }


def mlp_reference(x, params):
    """Pure-JAX f32 reference for correctness check."""
    xf = x.astype(jnp.float32)
    mean = jnp.mean(xf, axis=-1, keepdims=True)
    var = jnp.mean((xf - mean) ** 2, axis=-1, keepdims=True)
    h = (xf - mean) * jax.lax.rsqrt(var + LN_EPS) * params["ln_g"] + params["ln_b"]
    h = _leaky_relu(h @ params["w1"] + params["b1"])
    h = _leaky_relu(h @ params["w2"] + params["b2"])
    h = _leaky_relu(h @ params["w3"] + params["b3"])
    return h.astype(x.dtype)


if __name__ == "__main__":
    key = jax.random.PRNGKey(0)
    k_x, k_p = jax.random.split(key)

    batch, input_dim, hidden_size = 24, 16, 32
    x = jax.random.normal(k_x, (batch, input_dim), jnp.float32)
    params = init_params(k_p, input_dim, hidden_size)

    # One-time parameter packing (pad to lane multiples + bf16 cast).
    prepared = prepare_params(params)

    ref = mlp_reference(x, params)

    # Default path: auto-sized batch tile (single fused tile at this batch).
    out = jax.block_until_ready(mlp_forward(x, prepared))
    assert out.shape == (batch, hidden_size)
    # bf16 MXU operands vs f32 reference -> loosened tolerance.
    assert jnp.allclose(out, ref, atol=5e-2, rtol=5e-2), "mismatch vs reference"

    # Also exercise the multi-step batch grid with a small explicit tile.
    out_tiled = jax.block_until_ready(mlp_forward(x, prepared, block_b=8))
    assert jnp.allclose(out_tiled, ref, atol=5e-2, rtol=5e-2), "tiled mismatch"

    print("KERNEL_OK")
</pallas_src>

<mosaic_0001>
module attributes {stable_mosaic.version = 11 : i64} {
  func.func @mlp_kernel(%arg0: i32, %arg1: memref<24x128xf32, #tpu.memory_space<vmem>>, %arg2: memref<1x128xf32, #tpu.memory_space<vmem>>, %arg3: memref<1x128xf32, #tpu.memory_space<vmem>>, %arg4: memref<128x128xbf16, #tpu.memory_space<vmem>>, %arg5: memref<1x128xf32, #tpu.memory_space<vmem>>, %arg6: memref<128x128xbf16, #tpu.memory_space<vmem>>, %arg7: memref<1x128xf32, #tpu.memory_space<vmem>>, %arg8: memref<128x128xbf16, #tpu.memory_space<vmem>>, %arg9: memref<1x128xf32, #tpu.memory_space<vmem>>, %arg10: memref<24x128xf32, #tpu.memory_space<vmem>>) attributes {dimension_semantics = [#tpu.dimension_semantics<parallel>], iteration_bounds = array<i64: 1>, scalar_prefetch = 0 : i64, scratch_operands = 0 : i64, tpu.core_type = #tpu.core_type<tc>, window_params = [{transform_indices = @transform_0, window_bounds = array<i64: 24, 128>}, {pipeline_mode = #tpu.pipeline_mode<synchronous>, transform_indices = @transform_1, window_bounds = array<i64: 1, 128>}, {pipeline_mode = #tpu.pipeline_mode<synchronous>, transform_indices = @transform_2, window_bounds = array<i64: 1, 128>}, {pipeline_mode = #tpu.pipeline_mode<synchronous>, transform_indices = @transform_3, window_bounds = array<i64: 128, 128>}, {pipeline_mode = #tpu.pipeline_mode<synchronous>, transform_indices = @transform_4, window_bounds = array<i64: 1, 128>}, {pipeline_mode = #tpu.pipeline_mode<synchronous>, transform_indices = @transform_5, window_bounds = array<i64: 128, 128>}, {pipeline_mode = #tpu.pipeline_mode<synchronous>, transform_indices = @transform_6, window_bounds = array<i64: 1, 128>}, {pipeline_mode = #tpu.pipeline_mode<synchronous>, transform_indices = @transform_7, window_bounds = array<i64: 128, 128>}, {pipeline_mode = #tpu.pipeline_mode<synchronous>, transform_indices = @transform_8, window_bounds = array<i64: 1, 128>}, {transform_indices = @transform_9, window_bounds = array<i64: 24, 128>}]} {
    %c0 = arith.constant 0 : index
    %c0_0 = arith.constant 0 : index
    %0 = vector.load %arg1[%c0, %c0_0] : memref<24x128xf32, #tpu.memory_space<vmem>>, vector<24x128xf32>
    %cst = arith.constant dense<0.000000e+00> : vector<24xf32>
    %1 = vector.multi_reduction <add>, %0, %cst [1] : vector<24x128xf32> to vector<24xf32>
    %2 = vector.shape_cast %1 : vector<24xf32> to vector<24x1xf32>
    %3 = arith.mulf %0, %0 : vector<24x128xf32>
    %cst_1 = arith.constant dense<0.000000e+00> : vector<24xf32>
    %4 = vector.multi_reduction <add>, %3, %cst_1 [1] : vector<24x128xf32> to vector<24xf32>
    %5 = vector.shape_cast %4 : vector<24xf32> to vector<24x1xf32>
    %cst_2 = arith.constant 6.250000e-02 : f32
    %6 = vector.broadcast %cst_2 : f32 to vector<24x1xf32>
    %7 = arith.mulf %2, %6 : vector<24x1xf32>
    %cst_3 = arith.constant 6.250000e-02 : f32
    %8 = vector.broadcast %cst_3 : f32 to vector<24x1xf32>
    %9 = arith.mulf %5, %8 : vector<24x1xf32>
    %10 = arith.mulf %7, %7 : vector<24x1xf32>
    %11 = arith.subf %9, %10 : vector<24x1xf32>
    %cst_4 = arith.constant 0.000000e+00 : f32
    %12 = vector.broadcast %cst_4 : f32 to vector<24x1xf32>
    %13 = arith.maximumf %11, %12 : vector<24x1xf32>
    %14 = vector.broadcast %7 : vector<24x1xf32> to vector<24x128xf32>
    %15 = arith.subf %0, %14 : vector<24x128xf32>
    %cst_5 = arith.constant 9.99999974E-6 : f32
    %16 = vector.broadcast %cst_5 : f32 to vector<24x1xf32>
    %17 = arith.addf %13, %16 : vector<24x1xf32>
    %18 = math.rsqrt %17 : vector<24x1xf32>
    %19 = vector.broadcast %18 : vector<24x1xf32> to vector<24x128xf32>
    %20 = arith.mulf %15, %19 : vector<24x128xf32>
    %c0_6 = arith.constant 0 : index
    %c0_7 = arith.constant 0 : index
    %21 = vector.load %arg2[%c0_6, %c0_7] : memref<1x128xf32, #tpu.memory_space<vmem>>, vector<1x128xf32>
    %22 = vector.broadcast %21 : vector<1x128xf32> to vector<24x128xf32>
    %23 = arith.mulf %20, %22 : vector<24x128xf32>
    %c0_8 = arith.constant 0 : index
    %c0_9 = arith.constant 0 : index
    %24 = vector.load %arg3[%c0_8, %c0_9] : memref<1x128xf32, #tpu.memory_space<vmem>>, vector<1x128xf32>
    %25 = vector.broadcast %24 : vector<1x128xf32> to vector<24x128xf32>
    %26 = arith.addf %23, %25 : vector<24x128xf32>
    %27 = arith.truncf %26 : vector<24x128xf32> to vector<24x128xbf16>
    %c0_10 = arith.constant 0 : index
    %c0_11 = arith.constant 0 : index
    %28 = vector.load %arg4[%c0_10, %c0_11] : memref<128x128xbf16, #tpu.memory_space<vmem>>, vector<128x128xbf16>
    %cst_12 = arith.constant dense<0.000000e+00> : vector<24x128xf32>
    %29 = tpu.matmul %27, %28, %cst_12 {dimension_numbers = #tpu.dot_dimension_numbers<[1], [0], [0], [1], [0, 0, 1, 1], [], []>} : vector<24x128xbf16>, vector<128x128xbf16>, vector<24x128xf32> -> vector<24x128xf32>
    %c0_13 = arith.constant 0 : index
    %c0_14 = arith.constant 0 : index
    %30 = vector.load %arg5[%c0_13, %c0_14] : memref<1x128xf32, #tpu.memory_space<vmem>>, vector<1x128xf32>
    %31 = vector.broadcast %30 : vector<1x128xf32> to vector<24x128xf32>
    %32 = arith.addf %29, %31 : vector<24x128xf32>
    %cst_15 = arith.constant 0.000000e+00 : f32
    %33 = vector.broadcast %cst_15 : f32 to vector<24x128xf32>
    %34 = arith.cmpf oge, %32, %33 : vector<24x128xf32>
    %cst_16 = arith.constant 1.000000e-01 : f32
    %35 = vector.broadcast %cst_16 : f32 to vector<24x128xf32>
    %36 = arith.mulf %35, %32 : vector<24x128xf32>
    %37 = arith.select %34, %32, %36 : vector<24x128xi1>, vector<24x128xf32>
    %38 = arith.truncf %37 : vector<24x128xf32> to vector<24x128xbf16>
    %c0_17 = arith.constant 0 : index
    %c0_18 = arith.constant 0 : index
    %39 = vector.load %arg6[%c0_17, %c0_18] : memref<128x128xbf16, #tpu.memory_space<vmem>>, vector<128x128xbf16>
    %cst_19 = arith.constant dense<0.000000e+00> : vector<24x128xf32>
    %40 = tpu.matmul %38, %39, %cst_19 {dimension_numbers = #tpu.dot_dimension_numbers<[1], [0], [0], [1], [0, 0, 1, 1], [], []>} : vector<24x128xbf16>, vector<128x128xbf16>, vector<24x128xf32> -> vector<24x128xf32>
    %c0_20 = arith.constant 0 : index
    %c0_21 = arith.constant 0 : index
    %41 = vector.load %arg7[%c0_20, %c0_21] : memref<1x128xf32, #tpu.memory_space<vmem>>, vector<1x128xf32>
    %42 = vector.broadcast %41 : vector<1x128xf32> to vector<24x128xf32>
    %43 = arith.addf %40, %42 : vector<24x128xf32>
    %cst_22 = arith.constant 0.000000e+00 : f32
    %44 = vector.broadcast %cst_22 : f32 to vector<24x128xf32>
    %45 = arith.cmpf oge, %43, %44 : vector<24x128xf32>
    %cst_23 = arith.constant 1.000000e-01 : f32
    %46 = vector.broadcast %cst_23 : f32 to vector<24x128xf32>
    %47 = arith.mulf %46, %43 : vector<24x128xf32>
    %48 = arith.select %45, %43, %47 : vector<24x128xi1>, vector<24x128xf32>
    %49 = arith.truncf %48 : vector<24x128xf32> to vector<24x128xbf16>
    %c0_24 = arith.constant 0 : index
    %c0_25 = arith.constant 0 : index
    %50 = vector.load %arg8[%c0_24, %c0_25] : memref<128x128xbf16, #tpu.memory_space<vmem>>, vector<128x128xbf16>
    %cst_26 = arith.constant dense<0.000000e+00> : vector<24x128xf32>
    %51 = tpu.matmul %49, %50, %cst_26 {dimension_numbers = #tpu.dot_dimension_numbers<[1], [0], [0], [1], [0, 0, 1, 1], [], []>} : vector<24x128xbf16>, vector<128x128xbf16>, vector<24x128xf32> -> vector<24x128xf32>
    %c0_27 = arith.constant 0 : index
    %c0_28 = arith.constant 0 : index
    %52 = vector.load %arg9[%c0_27, %c0_28] : memref<1x128xf32, #tpu.memory_space<vmem>>, vector<1x128xf32>
    %53 = vector.broadcast %52 : vector<1x128xf32> to vector<24x128xf32>
    %54 = arith.addf %51, %53 : vector<24x128xf32>
    %cst_29 = arith.constant 0.000000e+00 : f32
    %55 = vector.broadcast %cst_29 : f32 to vector<24x128xf32>
    %56 = arith.cmpf oge, %54, %55 : vector<24x128xf32>
    %cst_30 = arith.constant 1.000000e-01 : f32
    %57 = vector.broadcast %cst_30 : f32 to vector<24x128xf32>
    %58 = arith.mulf %57, %54 : vector<24x128xf32>
    %59 = arith.select %56, %54, %58 : vector<24x128xi1>, vector<24x128xf32>
    %c0_31 = arith.constant 0 : index
    %c0_32 = arith.constant 0 : index
    %60 = vector.load %arg10[%c0_31, %c0_32] : memref<24x128xf32, #tpu.memory_space<vmem>>, vector<24x128xf32>
    tpu.vector_store %arg10[%c0_31, %c0_32], %59 {strides = array<i32>} : memref<24x128xf32, #tpu.memory_space<vmem>>, vector<24x128xf32>,
    return
  }
  func.func @transform_0(%arg0: i32) -> (i32, i32) {
    %c0_i32 = arith.constant 0 : i32
    %c0_i32_0 = arith.constant 0 : i32
    return %arg0, %c0_i32 : i32, i32
  }
  func.func @transform_1(%arg0: i32) -> (i32, i32) {
    %c0_i32 = arith.constant 0 : i32
    %c0_i32_0 = arith.constant 0 : i32
    %c0_i32_1 = arith.constant 0 : i32
    return %c0_i32, %c0_i32_0 : i32, i32
  }
  func.func @transform_2(%arg0: i32) -> (i32, i32) {
    %c0_i32 = arith.constant 0 : i32
    %c0_i32_0 = arith.constant 0 : i32
    %c0_i32_1 = arith.constant 0 : i32
    return %c0_i32, %c0_i32_0 : i32, i32
  }
  func.func @transform_3(%arg0: i32) -> (i32, i32) {
    %c0_i32 = arith.constant 0 : i32
    %c0_i32_0 = arith.constant 0 : i32
    %c0_i32_1 = arith.constant 0 : i32
    return %c0_i32, %c0_i32_0 : i32, i32
  }
  func.func @transform_4(%arg0: i32) -> (i32, i32) {
    %c0_i32 = arith.constant 0 : i32
    %c0_i32_0 = arith.constant 0 : i32
    %c0_i32_1 = arith.constant 0 : i32
    return %c0_i32, %c0_i32_0 : i32, i32
  }
  func.func @transform_5(%arg0: i32) -> (i32, i32) {
    %c0_i32 = arith.constant 0 : i32
    %c0_i32_0 = arith.constant 0 : i32
    %c0_i32_1 = arith.constant 0 : i32
    return %c0_i32, %c0_i32_0 : i32, i32
  }
  func.func @transform_6(%arg0: i32) -> (i32, i32) {
    %c0_i32 = arith.constant 0 : i32
    %c0_i32_0 = arith.constant 0 : i32
    %c0_i32_1 = arith.constant 0 : i32
    return %c0_i32, %c0_i32_0 : i32, i32
  }
  func.func @transform_7(%arg0: i32) -> (i32, i32) {
    %c0_i32 = arith.constant 0 : i32
    %c0_i32_0 = arith.constant 0 : i32
    %c0_i32_1 = arith.constant 0 : i32
    return %c0_i32, %c0_i32_0 : i32, i32
  }
  func.func @transform_8(%arg0: i32) -> (i32, i32) {
    %c0_i32 = arith.constant 0 : i32
    %c0_i32_0 = arith.constant 0 : i32
    %c0_i32_1 = arith.constant 0 : i32
    return %c0_i32, %c0_i32_0 : i32, i32
  }
  func.func @transform_9(%arg0: i32) -> (i32, i32) {
    %c0_i32 = arith.constant 0 : i32
    %c0_i32_0 = arith.constant 0 : i32
    return %arg0, %c0_i32 : i32, i32
  }
}

module attributes {stable_mosaic.version = 11 : i64} {
  func.func @mlp_kernel(%arg0: i32, %arg1: memref<24x128xf32, #tpu.memory_space<vmem>>, %arg2: memref<1x128xf32, #tpu.memory_space<vmem>>, %arg3: memref<1x128xf32, #tpu.memory_space<vmem>>, %arg4: memref<128x128xbf16, #tpu.memory_space<vmem>>, %arg5: memref<1x128xf32, #tpu.memory_space<vmem>>, %arg6: memref<128x128xbf16, #tpu.memory_space<vmem>>, %arg7: memref<1x128xf32, #tpu.memory_space<vmem>>, %arg8: memref<128x128xbf16, #tpu.memory_space<vmem>>, %arg9: memref<1x128xf32, #tpu.memory_space<vmem>>, %arg10: memref<24x128xf32, #tpu.memory_space<vmem>>) attributes {dimension_semantics = [#tpu.dimension_semantics<parallel>], iteration_bounds = array<i64: 1>, scalar_prefetch = 0 : i64, scratch_operands = 0 : i64, tpu.core_type = #tpu.core_type<tc>, window_params = [{transform_indices = @transform_0, window_bounds = array<i64: 24, 128>}, {pipeline_mode = #tpu.pipeline_mode<synchronous>, transform_indices = @transform_1, window_bounds = array<i64: 1, 128>}, {pipeline_mode = #tpu.pipeline_mode<synchronous>, transform_indices = @transform_2, window_bounds = array<i64: 1, 128>}, {pipeline_mode = #tpu.pipeline_mode<synchronous>, transform_indices = @transform_3, window_bounds = array<i64: 128, 128>}, {pipeline_mode = #tpu.pipeline_mode<synchronous>, transform_indices = @transform_4, window_bounds = array<i64: 1, 128>}, {pipeline_mode = #tpu.pipeline_mode<synchronous>, transform_indices = @transform_5, window_bounds = array<i64: 128, 128>}, {pipeline_mode = #tpu.pipeline_mode<synchronous>, transform_indices = @transform_6, window_bounds = array<i64: 1, 128>}, {pipeline_mode = #tpu.pipeline_mode<synchronous>, transform_indices = @transform_7, window_bounds = array<i64: 128, 128>}, {pipeline_mode = #tpu.pipeline_mode<synchronous>, transform_indices = @transform_8, window_bounds = array<i64: 1, 128>}, {transform_indices = @transform_9, window_bounds = array<i64: 24, 128>}]} {
    %c0 = arith.constant 0 : index
    %c0_0 = arith.constant 0 : index
    %0 = vector.load %arg1[%c0, %c0_0] : memref<24x128xf32, #tpu.memory_space<vmem>>, vector<24x128xf32>
    %cst = arith.constant dense<0.000000e+00> : vector<24xf32>
    %1 = vector.multi_reduction <add>, %0, %cst [1] : vector<24x128xf32> to vector<24xf32>
    %2 = vector.shape_cast %1 : vector<24xf32> to vector<24x1xf32>
    %3 = arith.mulf %0, %0 : vector<24x128xf32>
    %cst_1 = arith.constant dense<0.000000e+00> : vector<24xf32>
    %4 = vector.multi_reduction <add>, %3, %cst_1 [1] : vector<24x128xf32> to vector<24xf32>
    %5 = vector.shape_cast %4 : vector<24xf32> to vector<24x1xf32>
    %cst_2 = arith.constant 6.250000e-02 : f32
    %6 = vector.broadcast %cst_2 : f32 to vector<24x1xf32>
    %7 = arith.mulf %2, %6 : vector<24x1xf32>
    %cst_3 = arith.constant 6.250000e-02 : f32
    %8 = vector.broadcast %cst_3 : f32 to vector<24x1xf32>
    %9 = arith.mulf %5, %8 : vector<24x1xf32>
    %10 = arith.mulf %7, %7 : vector<24x1xf32>
    %11 = arith.subf %9, %10 : vector<24x1xf32>
    %cst_4 = arith.constant 0.000000e+00 : f32
    %12 = vector.broadcast %cst_4 : f32 to vector<24x1xf32>
    %13 = arith.maximumf %11, %12 : vector<24x1xf32>
    %14 = vector.broadcast %7 : vector<24x1xf32> to vector<24x128xf32>
    %15 = arith.subf %0, %14 : vector<24x128xf32>
    %cst_5 = arith.constant 9.99999974E-6 : f32
    %16 = vector.broadcast %cst_5 : f32 to vector<24x1xf32>
    %17 = arith.addf %13, %16 : vector<24x1xf32>
    %18 = math.rsqrt %17 : vector<24x1xf32>
    %19 = vector.broadcast %18 : vector<24x1xf32> to vector<24x128xf32>
    %20 = arith.mulf %15, %19 : vector<24x128xf32>
    %c0_6 = arith.constant 0 : index
    %c0_7 = arith.constant 0 : index
    %21 = vector.load %arg2[%c0_6, %c0_7] : memref<1x128xf32, #tpu.memory_space<vmem>>, vector<1x128xf32>
    %22 = vector.broadcast %21 : vector<1x128xf32> to vector<24x128xf32>
    %23 = arith.mulf %20, %22 : vector<24x128xf32>
    %c0_8 = arith.constant 0 : index
    %c0_9 = arith.constant 0 : index
    %24 = vector.load %arg3[%c0_8, %c0_9] : memref<1x128xf32, #tpu.memory_space<vmem>>, vector<1x128xf32>
    %25 = vector.broadcast %24 : vector<1x128xf32> to vector<24x128xf32>
    %26 = arith.addf %23, %25 : vector<24x128xf32>
    %27 = arith.truncf %26 : vector<24x128xf32> to vector<24x128xbf16>
    %c0_10 = arith.constant 0 : index
    %c0_11 = arith.constant 0 : index
    %28 = vector.load %arg4[%c0_10, %c0_11] : memref<128x128xbf16, #tpu.memory_space<vmem>>, vector<128x128xbf16>
    %cst_12 = arith.constant dense<0.000000e+00> : vector<24x128xf32>
    %29 = tpu.matmul %27, %28, %cst_12 {dimension_numbers = #tpu.dot_dimension_numbers<[1], [0], [0], [1], [0, 0, 1, 1], [], []>} : vector<24x128xbf16>, vector<128x128xbf16>, vector<24x128xf32> -> vector<24x128xf32>
    %c0_13 = arith.constant 0 : index
    %c0_14 = arith.constant 0 : index
    %30 = vector.load %arg5[%c0_13, %c0_14] : memref<1x128xf32, #tpu.memory_space<vmem>>, vector<1x128xf32>
    %31 = vector.broadcast %30 : vector<1x128xf32> to vector<24x128xf32>
    %32 = arith.addf %29, %31 : vector<24x128xf32>
    %cst_15 = arith.constant 0.000000e+00 : f32
    %33 = vector.broadcast %cst_15 : f32 to vector<24x128xf32>
    %34 = arith.cmpf oge, %32, %33 : vector<24x128xf32>
    %cst_16 = arith.constant 1.000000e-01 : f32
    %35 = vector.broadcast %cst_16 : f32 to vector<24x128xf32>
    %36 = arith.mulf %35, %32 : vector<24x128xf32>
    %37 = arith.select %34, %32, %36 : vector<24x128xi1>, vector<24x128xf32>
    %38 = arith.truncf %37 : vector<24x128xf32> to vector<24x128xbf16>
    %c0_17 = arith.constant 0 : index
    %c0_18 = arith.constant 0 : index
    %39 = vector.load %arg6[%c0_17, %c0_18] : memref<128x128xbf16, #tpu.memory_space<vmem>>, vector<128x128xbf16>
    %cst_19 = arith.constant dense<0.000000e+00> : vector<24x128xf32>
    %40 = tpu.matmul %38, %39, %cst_19 {dimension_numbers = #tpu.dot_dimension_numbers<[1], [0], [0], [1], [0, 0, 1, 1], [], []>} : vector<24x128xbf16>, vector<128x128xbf16>, vector<24x128xf32> -> vector<24x128xf32>
    %c0_20 = arith.constant 0 : index
    %c0_21 = arith.constant 0 : index
    %41 = vector.load %arg7[%c0_20, %c0_21] : memref<1x128xf32, #tpu.memory_space<vmem>>, vector<1x128xf32>
    %42 = vector.broadcast %41 : vector<1x128xf32> to vector<24x128xf32>
    %43 = arith.addf %40, %42 : vector<24x128xf32>
    %cst_22 = arith.constant 0.000000e+00 : f32
    %44 = vector.broadcast %cst_22 : f32 to vector<24x128xf32>
    %45 = arith.cmpf oge, %43, %44 : vector<24x128xf32>
    %cst_23 = arith.constant 1.000000e-01 : f32
    %46 = vector.broadcast %cst_23 : f32 to vector<24x128xf32>
    %47 = arith.mulf %46, %43 : vector<24x128xf32>
    %48 = arith.select %45, %43, %47 : vector<24x128xi1>, vector<24x128xf32>
    %49 = arith.truncf %48 : vector<24x128xf32> to vector<24x128xbf16>
    %c0_24 = arith.constant 0 : index
    %c0_25 = arith.constant 0 : index
    %50 = vector.load %arg8[%c0_24, %c0_25] : memref<128x128xbf16, #tpu.memory_space<vmem>>, vector<128x128xbf16>
    %cst_26 = arith.constant dense<0.000000e+00> : vector<24x128xf32>
    %51 = tpu.matmul %49, %50, %cst_26 {dimension_numbers = #tpu.dot_dimension_numbers<[1], [0], [0], [1], [0, 0, 1, 1], [], []>} : vector<24x128xbf16>, vector<128x128xbf16>, vector<24x128xf32> -> vector<24x128xf32>
    %c0_27 = arith.constant 0 : index
    %c0_28 = arith.constant 0 : index
    %52 = vector.load %arg9[%c0_27, %c0_28] : memref<1x128xf32, #tpu.memory_space<vmem>>, vector<1x128xf32>
    %53 = vector.broadcast %52 : vector<1x128xf32> to vector<24x128xf32>
    %54 = arith.addf %51, %53 : vector<24x128xf32>
    %cst_29 = arith.constant 0.000000e+00 : f32
    %55 = vector.broadcast %cst_29 : f32 to vector<24x128xf32>
    %56 = arith.cmpf oge, %54, %55 : vector<24x128xf32>
    %cst_30 = arith.constant 1.000000e-01 : f32
    %57 = vector.broadcast %cst_30 : f32 to vector<24x128xf32>
    %58 = arith.mulf %57, %54 : vector<24x128xf32>
    %59 = arith.select %56, %54, %58 : vector<24x128xi1>, vector<24x128xf32>
    %c0_31 = arith.constant 0 : index
    %c0_32 = arith.constant 0 : index
    %60 = vector.load %arg10[%c0_31, %c0_32] : memref<24x128xf32, #tpu.memory_space<vmem>>, vector<24x128xf32>
    tpu.vector_store %arg10[%c0_31, %c0_32], %59 {strides = array<i32>} : memref<24x128xf32, #tpu.memory_space<vmem>>, vector<24x128xf32>,
    return
  }
  func.func @transform_0(%arg0: i32) -> (i32, i32) {
    %c0_i32 = arith.constant 0 : i32
    %c0_i32_0 = arith.constant 0 : i32
    return %arg0, %c0_i32 : i32, i32
  }
  func.func @transform_1(%arg0: i32) -> (i32, i32) {
    %c0_i32 = arith.constant 0 : i32
    %c0_i32_0 = arith.constant 0 : i32
    %c0_i32_1 = arith.constant 0 : i32
    return %c0_i32, %c0_i32_0 : i32, i32
  }
  func.func @transform_2(%arg0: i32) -> (i32, i32) {
    %c0_i32 = arith.constant 0 : i32
    %c0_i32_0 = arith.constant 0 : i32
    %c0_i32_1 = arith.constant 0 : i32
    return %c0_i32, %c0_i32_0 : i32, i32
  }
  func.func @transform_3(%arg0: i32) -> (i32, i32) {
    %c0_i32 = arith.constant 0 : i32
    %c0_i32_0 = arith.constant 0 : i32
    %c0_i32_1 = arith.constant 0 : i32
    return %c0_i32, %c0_i32_0 : i32, i32
  }
  func.func @transform_4(%arg0: i32) -> (i32, i32) {
    %c0_i32 = arith.constant 0 : i32
    %c0_i32_0 = arith.constant 0 : i32
    %c0_i32_1 = arith.constant 0 : i32
    return %c0_i32, %c0_i32_0 : i32, i32
  }
  func.func @transform_5(%arg0: i32) -> (i32, i32) {
    %c0_i32 = arith.constant 0 : i32
    %c0_i32_0 = arith.constant 0 : i32
    %c0_i32_1 = arith.constant 0 : i32
    return %c0_i32, %c0_i32_0 : i32, i32
  }
  func.func @transform_6(%arg0: i32) -> (i32, i32) {
    %c0_i32 = arith.constant 0 : i32
    %c0_i32_0 = arith.constant 0 : i32
    %c0_i32_1 = arith.constant 0 : i32
    return %c0_i32, %c0_i32_0 : i32, i32
  }
  func.func @transform_7(%arg0: i32) -> (i32, i32) {
    %c0_i32 = arith.constant 0 : i32
    %c0_i32_0 = arith.constant 0 : i32
    %c0_i32_1 = arith.constant 0 : i32
    return %c0_i32, %c0_i32_0 : i32, i32
  }
  func.func @transform_8(%arg0: i32) -> (i32, i32) {
    %c0_i32 = arith.constant 0 : i32
    %c0_i32_0 = arith.constant 0 : i32
    %c0_i32_1 = arith.constant 0 : i32
    return %c0_i32, %c0_i32_0 : i32, i32
  }
  func.func @transform_9(%arg0: i32) -> (i32, i32) {
    %c0_i32 = arith.constant 0 : i32
    %c0_i32_0 = arith.constant 0 : i32
    return %arg0, %c0_i32 : i32, i32
  }
}

</mosaic_0001>

<llo_original>
// kernel: _mlp_forward_impl.1
$region0: #{_mlp_forward_impl.1}
  #allocation0 [shape = 'u32[]', space=smem, size = 0x4, offset = 0x4, fixed_abs, tag = 'smem constant byte address 0x4 - core index']
  #allocation1 [shape = 'u32[72,128]{1,0:T(1,128)}', space=vmem, size = 0x9000, scoped, tag = 'internal scratch']
  %s0 = inlined_call_operand.vmem [shape: f32[24,128], index: 0, kind: input, shape index: {}]
  %s1 = inlined_call_operand.vmem [shape: f32[1,128], index: 1, kind: input, shape index: {}]
  %s2 = inlined_call_operand.vmem [shape: f32[1,128], index: 2, kind: input, shape index: {}]
  %s3 = inlined_call_operand.vmem [shape: bf16[128,128], index: 3, kind: input, shape index: {}]
  %s4 = inlined_call_operand.vmem [shape: f32[1,128], index: 4, kind: input, shape index: {}]
  %s5 = inlined_call_operand.hbm [shape: bf16[128,128], index: 5, kind: input, shape index: {}]
  %s6 = inlined_call_operand.vmem [shape: f32[1,128], index: 6, kind: input, shape index: {}]
  %s7 = inlined_call_operand.hbm [shape: bf16[128,128], index: 7, kind: input, shape index: {}]
  %s8 = inlined_call_operand.vmem [shape: f32[1,128], index: 8, kind: input, shape index: {}]
  %s9 = inlined_call_operand.hbm [shape: f32[24,128], index: 9, kind: output, shape index: {}]
  %s10 = sld [smem:[#allocation0]]
  $region54: #{_mlp_forward_impl.1} parent=0
    _
  %s12 = ssub.s32 1, %s10
  %s13 = scalar_select 0, %s12, %s10
  $region1: #{_mlp_forward_impl.1} parent=0
    #allocation2 [shape = 'u8[32768]{0}', space=vmem, size = 0x8000, scoped, tag = 'input window, operand 5, single buffered']
    #allocation3 [shape = 's32[1]{0}', space=sflag, size = 0x4, scoped, tag = 'scoped memory for _mlp_forward_impl.1']
    #allocation4 [shape = 's32[1]{0}', space=sflag, size = 0x4, scoped, tag = 'scoped memory for _mlp_forward_impl.1']
    #allocation5 [shape = 'u8[32768]{0}', space=vmem, size = 0x8000, scoped, tag = 'input window, operand 7, single buffered']
    #allocation6 [shape = 's32[1]{0}', space=sflag, size = 0x4, scoped, tag = 'scoped memory for _mlp_forward_impl.1']
    #allocation7 [shape = 'u8[12288]{0}', space=vmem, size = 0x3000, scoped, tag = 'output window, operand 0, single buffered']
    %14 = vsyncpa [#allocation3], 0
    %15 = vsyncpa [#allocation6], 0
    %16 = vsyncpa [#allocation4], 0
    // Predicated region
    $region2: #{_mlp_forward_impl.1} parent=1 // pred_check
      _
    $region3: #{_mlp_forward_impl.1} parent=1 // pred_check_branch
      %18 = sbr.rel (0) target = $region5
    $region4: #{_mlp_forward_impl.1} parent=1 // pred_region
      _
    $region5: #{_mlp_forward_impl.1} parent=1 // pred_fallthru
      _
    // Predicated region
    $region6: #{_mlp_forward_impl.1} parent=1 // pred_check
      _
    $region7: #{_mlp_forward_impl.1} parent=1 // pred_check_branch
      %20 = sbr.rel (0) target = $region9
    $region8: #{_mlp_forward_impl.1} parent=1 // pred_region
      _
    $region9: #{_mlp_forward_impl.1} parent=1 // pred_fallthru
      _
    // Predicated region
    $region10: #{_mlp_forward_impl.1} parent=1 // pred_check
      _
    $region11: #{_mlp_forward_impl.1} parent=1 // pred_check_branch
      %22 = sbr.rel (0) target = $region13
    $region12: #{_mlp_forward_impl.1} parent=1 // pred_region
      _
    $region13: #{_mlp_forward_impl.1} parent=1 // pred_fallthru
      _
    // Predicated region
    $region14: #{_mlp_forward_impl.1} parent=1 // pred_check
      _
    $region15: #{_mlp_forward_impl.1} parent=1 // pred_check_branch
      %24 = sbr.rel (0) target = $region17
    $region16: #{_mlp_forward_impl.1} parent=1 // pred_region
      _
    $region17: #{_mlp_forward_impl.1} parent=1 // pred_fallthru
      _
    // Predicated region
    $region18: #{_mlp_forward_impl.1} parent=1 // pred_check
      _
    $region19: #{_mlp_forward_impl.1} parent=1 // pred_check_branch
      %26 = sbr.rel (0) target = $region21
    $region20: #{_mlp_forward_impl.1} parent=1 // pred_region
      _
    $region21: #{_mlp_forward_impl.1} parent=1 // pred_fallthru
      _
    // Predicated region
    $region22: #{_mlp_forward_impl.1} parent=1 // pred_check
      _
    $region23: #{_mlp_forward_impl.1} parent=1 // pred_check_branch
      %28 = sbr.rel (0) target = $region25
    $region24: #{_mlp_forward_impl.1} parent=1 // pred_region
      %30 = vsyncadd [#allocation3], 0
      %s31 = sshll.u32 %s5, 4
      %s32 = int_to_ptr.hbm [resolvable:$true] %s31
      %s33 = sshll.u32 [#allocation2], 4
      %s34 = int_to_ptr.vmem [resolvable:$true] %s33
      %39 = dma.hbm_to_vmem [thread:$0]  %s32, 1024, %s34, [#allocation3], 64, 64, 4
    $region25: #{_mlp_forward_impl.1} parent=1 // pred_fallthru
      _
    // Predicated region
    $region26: #{_mlp_forward_impl.1} parent=1 // pred_check
      _
    $region27: #{_mlp_forward_impl.1} parent=1 // pred_check_branch
      %41 = sbr.rel (0) target = $region29
    $region28: #{_mlp_forward_impl.1} parent=1 // pred_region
      _
    $region29: #{_mlp_forward_impl.1} parent=1 // pred_fallthru
      _
    // Predicated region
    $region30: #{_mlp_forward_impl.1} parent=1 // pred_check
      _
    $region31: #{_mlp_forward_impl.1} parent=1 // pred_check_branch
      %43 = sbr.rel (0) target = $region33
    $region32: #{_mlp_forward_impl.1} parent=1 // pred_region
      %45 = vsyncadd [#allocation6], 0
      %s46 = sshll.u32 %s7, 4
      %s47 = int_to_ptr.hbm [resolvable:$true] %s46
      %s48 = sshll.u32 [#allocation5], 4
      %s49 = int_to_ptr.vmem [resolvable:$true] %s48
      %54 = dma.hbm_to_vmem [thread:$0]  %s47, 1024, %s49, [#allocation6], 64, 64, 4
    $region33: #{_mlp_forward_impl.1} parent=1 // pred_fallthru
      _
    // Predicated region
    $region34: #{_mlp_forward_impl.1} parent=1 // pred_check
      _
    $region35: #{_mlp_forward_impl.1} parent=1 // pred_check_branch
      %56 = sbr.rel (0) target = $region37
    $region36: #{_mlp_forward_impl.1} parent=1 // pred_region
      _
    $region37: #{_mlp_forward_impl.1} parent=1 // pred_fallthru
      _
    // Predicated region
    $region38: #{_mlp_forward_impl.1} parent=1 // pred_check
      _
    $region39: #{_mlp_forward_impl.1} parent=1 // pred_check_branch
      %58 = sbr.rel (0) target = $region41
    $region40: #{_mlp_forward_impl.1} parent=1 // pred_region
      %60 = dma.done [#allocation3], 1024
    $region41: #{_mlp_forward_impl.1} parent=1 // pred_fallthru
      _
    // Predicated region
    $region42: #{_mlp_forward_impl.1} parent=1 // pred_check
      _
    $region43: #{_mlp_forward_impl.1} parent=1 // pred_check_branch
      %62 = sbr.rel (0) target = $region45
    $region44: #{_mlp_forward_impl.1} parent=1 // pred_region
      %64 = dma.done [#allocation6], 1024
    $region45: #{_mlp_forward_impl.1} parent=1 // pred_fallthru
      _
    %v65 = vld [vmem:[%s0] sm:$0xff]
    %v66 = vld [vmem:[%s0 + $0x8] sm:$0xff]
    %v67 = vld [vmem:[%s0 + $0x10] sm:$0xff]
    %68 = vadd.xlane.f32.xlu0 %v65
    %v69 = vpop.xlane.xlu0 %68
    %70 = vadd.xlane.f32.xlu0 %v66
    %v71 = vpop.xlane.xlu0 %70
    %72 = vadd.xlane.f32.xlu0 %v67
    %v73 = vpop.xlane.xlu0 %72
    %v74 = vmul.f32 %v65, %v65
    %v75 = vmul.f32 %v66, %v66
    %v76 = vmul.f32 %v67, %v67
    %77 = vadd.xlane.f32.xlu0 %v74
    %v78 = vpop.xlane.xlu0 %77
    %79 = vadd.xlane.f32.xlu0 %v75
    %v80 = vpop.xlane.xlu0 %79
    %81 = vadd.xlane.f32.xlu0 %v76
    %v82 = vpop.xlane.xlu0 %81
    %v83 = vmul.f32 %v69, 0.0625
    %v84 = vmul.f32 %v71, 0.0625
    %v85 = vmul.f32 %v73, 0.0625
    %v86 = vmul.f32 %v78, 0.0625
    %v87 = vmul.f32 %v80, 0.0625
    %v88 = vmul.f32 %v82, 0.0625
    %v89 = vmul.f32 %v83, %v83
    %v90 = vmul.f32 %v84, %v84
    %v91 = vmul.f32 %v85, %v85
    %v92 = vsub.f32 %v86, %v89
    %v93 = vsub.f32 %v87, %v90
    %v94 = vsub.f32 %v88, %v91
    %v95 = vmax.f32 %v92, 0.0
    %v96 = vmax.f32 %v93, 0.0
    %v97 = vmax.f32 %v94, 0.0
    %v98 = vsub.f32 %v65, %v83
    %v99 = vsub.f32 %v66, %v84
    %v100 = vsub.f32 %v67, %v85
    %v101 = vadd.f32 %v95, 1e-05
    %v102 = vadd.f32 %v96, 1e-05
    %v103 = vadd.f32 %v97, 1e-05
    %v104 = vrsqrt.pop %v101
    %v105 = vmul.f32 %v104, %v101
    %v106 = vmul.f32 %v105, %v104
    %v107 = vmul.f32 0.5, %v106
    %v108 = vsub.f32 1.5, %v107
    %v109 = vmul.f32 %v104, %v108
    %vm110 = vweird.f32 %v101
    %vm111 = vweird.f32 %v104
    %vm112 = vmor %vm110, %vm111
    %v113 = vsel %vm112, %v104, %v109
    %v114 = vrsqrt.pop %v102
    %v115 = vmul.f32 %v114, %v102
    %v116 = vmul.f32 %v115, %v114
    %v117 = vmul.f32 0.5, %v116
    %v118 = vsub.f32 1.5, %v117
    %v119 = vmul.f32 %v114, %v118
    %vm120 = vweird.f32 %v102
    %vm121 = vweird.f32 %v114
    %vm122 = vmor %vm120, %vm121
    %v123 = vsel %vm122, %v114, %v119
    %v124 = vrsqrt.pop %v103
    %v125 = vmul.f32 %v124, %v103
    %v126 = vmul.f32 %v125, %v124
    %v127 = vmul.f32 0.5, %v126
    %v128 = vsub.f32 1.5, %v127
    %v129 = vmul.f32 %v124, %v128
    %vm130 = vweird.f32 %v103
    %vm131 = vweird.f32 %v124
    %vm132 = vmor %vm130, %vm131
    %v133 = vsel %vm132, %v124, %v129
    %v134 = vmul.f32 %v98, %v113
    %v135 = vmul.f32 %v99, %v123
    %v136 = vmul.f32 %v100, %v133
    %v137 = vld [vmem:[%s1] sm:$0x1]
    %v139 = vperm.slane %v137, 0
    %v141 = vmul.f32 %v134, %v139
    %v142 = vmul.f32 %v135, %v139
    %v143 = vmul.f32 %v136, %v139
    %v144 = vld [vmem:[%s2] sm:$0x1]
    %v146 = vperm.slane %v144, 0
    %v148 = vadd.f32 %v141, %v146
    %v149 = vadd.f32 %v142, %v146
    %v150 = vadd.f32 %v143, %v146
    %v151 = vpack.c.bf16 %v149, %v148
    %v152 = vpack.c.bf16 %v150, %v150
    %v153 = vld [vmem:[%s3] sm:$0xf]
    %v154 = vld [vmem:[%s3 + $0x4] sm:$0xf]
    %v155 = vld [vmem:[%s3 + $0x8] sm:$0xf]
    %v156 = vld [vmem:[%s3 + $0xc] sm:$0xf]
    %v157 = vld [vmem:[%s3 + $0x10] sm:$0xf]
    %v158 = vld [vmem:[%s3 + $0x14] sm:$0xf]
    %v159 = vld [vmem:[%s3 + $0x18] sm:$0xf]
    %v160 = vld [vmem:[%s3 + $0x1c] sm:$0xf]
    %v161 = vld [vmem:[%s3 + $0x20] sm:$0xf]
    %v162 = vld [vmem:[%s3 + $0x24] sm:$0xf]
    %v163 = vld [vmem:[%s3 + $0x28] sm:$0xf]
    %v164 = vld [vmem:[%s3 + $0x2c] sm:$0xf]
    %v165 = vld [vmem:[%s3 + $0x30] sm:$0xf]
    %v166 = vld [vmem:[%s3 + $0x34] sm:$0xf]
    %v167 = vld [vmem:[%s3 + $0x38] sm:$0xf]
    %v168 = vld [vmem:[%s3 + $0x3c] sm:$0xf]
    %v169 = vld [vmem:[%s4] sm:$0x1]
    %v171 = vperm.slane %v169, 0
    %v189 = vunpack.c.l.b16 %v153
    %v190 = vunpack.c.l.b16 %v154
    %v191 = vunpack.c.l.b16 %v155
    %v192 = vunpack.c.l.b16 %v156
    %v193 = vunpack.c.l.b16 %v157
    %v194 = vunpack.c.l.b16 %v158
    %v195 = vunpack.c.l.b16 %v159
    %v196 = vunpack.c.l.b16 %v160
    %v197 = vunpack.c.l.b16 %v161
    %v198 = vunpack.c.l.b16 %v162
    %v199 = vunpack.c.l.b16 %v163
    %v200 = vunpack.c.l.b16 %v164
    %v201 = vunpack.c.l.b16 %v165
    %v202 = vunpack.c.l.b16 %v166
    %v203 = vunpack.c.l.b16 %v167
    %v204 = vunpack.c.l.b16 %v168
    %v205 = vpack.c.b16 %v190, %v189
    %v206 = vpack.c.b16 %v192, %v191
    %v207 = vpack.c.b16 %v194, %v193
    %v208 = vpack.c.b16 %v196, %v195
    %v209 = vpack.c.b16 %v198, %v197
    %v210 = vpack.c.b16 %v200, %v199
    %v211 = vpack.c.b16 %v202, %v201
    %v212 = vpack.c.b16 %v204, %v203
    %221 = vmatpush.bf16.msra.mxu0 %v212
    %222 = vmatpush.bf16.msra.mxu0 %v211
    %223 = vmatpush.bf16.msra.mxu0 %v210
    %224 = vmatpush.bf16.msra.mxu0 %v209
    %225 = vmatpush.bf16.msra.mxu0 %v208
    %226 = vmatpush.bf16.msra.mxu0 %v207
    %227 = vmatpush.bf16.msra.mxu0 %v206
    %228 = vmatpush.bf16.msra.mxu0 %v205
    %229 = vmatmul.bf16.gmra.mxu0 %v151
    %v230 = vpop.f32.mrf.mxu0
    %v231 = vadd.f32 %v171, %v230
    %v232 = vpop.f32.mrf.mxu0
    %v233 = vadd.f32 %v171, %v232
    %234 = vmatmul.bf16.gmra.mxu0 %v152
    %v235 = vpop.f32.mrf.mxu0
    %v236 = vadd.f32 %v171, %v235
    %v237 = vpop.f32.mrf.mxu0
    %238 = vdwg.mxu0
    %vm239 = vcmp.ge.f32.partialorder %v231, 0.0
    %vm240 = vcmp.ge.f32.partialorder %v233, 0.0
    %vm241 = vcmp.ge.f32.partialorder %v236, 0.0
    %v242 = vmul.f32 %v231, 0.1
    %v243 = vmul.f32 %v233, 0.1
    %v244 = vmul.f32 %v236, 0.1
    %v245 = vsel %vm239, %v231, %v242
    %v246 = vsel %vm240, %v233, %v243
    %v247 = vsel %vm241, %v236, %v244
    %v248 = vpack.c.bf16 %v246, %v245
    %v249 = vpack.c.bf16 %v247, %v247
    %v250 = vld [vmem:[#allocation2] sm:$0xf]
    %v251 = vld [vmem:[#allocation2 + $0x4] sm:$0xf]
    %v252 = vld [vmem:[#allocation2 + $0x8] sm:$0xf]
    %v253 = vld [vmem:[#allocation2 + $0xc] sm:$0xf]
    %v254 = vld [vmem:[#allocation2 + $0x10] sm:$0xf]
    %v255 = vld [vmem:[#allocation2 + $0x14] sm:$0xf]
    %v256 = vld [vmem:[#allocation2 + $0x18] sm:$0xf]
    %v257 = vld [vmem:[#allocation2 + $0x1c] sm:$0xf]
    %v258 = vld [vmem:[#allocation2 + $0x20] sm:$0xf]
    %v259 = vld [vmem:[#allocation2 + $0x24] sm:$0xf]
    %v260 = vld [vmem:[#allocation2 + $0x28] sm:$0xf]
    %v261 = vld [vmem:[#allocation2 + $0x2c] sm:$0xf]
    %v262 = vld [vmem:[#allocation2 + $0x30] sm:$0xf]
    %v263 = vld [vmem:[#allocation2 + $0x34] sm:$0xf]
    %v264 = vld [vmem:[#allocation2 + $0x38] sm:$0xf]
    %v265 = vld [vmem:[#allocation2 + $0x3c] sm:$0xf]
    %v266 = vld [vmem:[%s6] sm:$0x1]
    %v268 = vperm.slane %v266, 0
    %v286 = vunpack.c.l.b16 %v250
    %v287 = vunpack.c.l.b16 %v251
    %v288 = vunpack.c.l.b16 %v252
    %v289 = vunpack.c.l.b16 %v253
    %v290 = vunpack.c.l.b16 %v254
    %v291 = vunpack.c.l.b16 %v255
    %v292 = vunpack.c.l.b16 %v256
    %v293 = vunpack.c.l.b16 %v257
    %v294 = vunpack.c.l.b16 %v258
    %v295 = vunpack.c.l.b16 %v259
    %v296 = vunpack.c.l.b16 %v260
    %v297 = vunpack.c.l.b16 %v261
    %v298 = vunpack.c.l.b16 %v262
    %v299 = vunpack.c.l.b16 %v263
    %v300 = vunpack.c.l.b16 %v264
    %v301 = vunpack.c.l.b16 %v265
    %v302 = vpack.c.b16 %v287, %v286
    %v303 = vpack.c.b16 %v289, %v288
    %v304 = vpack.c.b16 %v291, %v290
    %v305 = vpack.c.b16 %v293, %v292
    %v306 = vpack.c.b16 %v295, %v294
    %v307 = vpack.c.b16 %v297, %v296
    %v308 = vpack.c.b16 %v299, %v298
    %v309 = vpack.c.b16 %v301, %v300
    %318 = vmatpush.bf16.msra.mxu0 %v309
    %319 = vmatpush.bf16.msra.mxu0 %v308
    %320 = vmatpush.bf16.msra.mxu0 %v307
    %321 = vmatpush.bf16.msra.mxu0 %v306
    %322 = vmatpush.bf16.msra.mxu0 %v305
    %323 = vmatpush.bf16.msra.mxu0 %v304
    %324 = vmatpush.bf16.msra.mxu0 %v303
    %325 = vmatpush.bf16.msra.mxu0 %v302
    %326 = vmatmul.bf16.gmra.mxu0 %v248
    %v327 = vpop.f32.mrf.mxu0
    %v328 = vadd.f32 %v268, %v327
    %v329 = vpop.f32.mrf.mxu0
    %v330 = vadd.f32 %v268, %v329
    %331 = vmatmul.bf16.gmra.mxu0 %v249
    %v332 = vpop.f32.mrf.mxu0
    %v333 = vadd.f32 %v268, %v332
    %v334 = vpop.f32.mrf.mxu0
    %335 = vdwg.mxu0
    %vm336 = vcmp.ge.f32.partialorder %v328, 0.0
    %vm337 = vcmp.ge.f32.partialorder %v330, 0.0
    %vm338 = vcmp.ge.f32.partialorder %v333, 0.0
    %v339 = vmul.f32 %v328, 0.1
    %v340 = vmul.f32 %v330, 0.1
    %v341 = vmul.f32 %v333, 0.1
    %v342 = vsel %vm336, %v328, %v339
    %v343 = vsel %vm337, %v330, %v340
    %v344 = vsel %vm338, %v333, %v341
    %v345 = vpack.c.bf16 %v343, %v342
    %v346 = vpack.c.bf16 %v344, %v344
    %v347 = vld [vmem:[#allocation5] sm:$0xf]
    %v348 = vld [vmem:[#allocation5 + $0x4] sm:$0xf]
    %v349 = vld [vmem:[#allocation5 + $0x8] sm:$0xf]
    %v350 = vld [vmem:[#allocation5 + $0xc] sm:$0xf]
    %v351 = vld [vmem:[#allocation5 + $0x10] sm:$0xf]
    %v352 = vld [vmem:[#allocation5 + $0x14] sm:$0xf]
    %v353 = vld [vmem:[#allocation5 + $0x18] sm:$0xf]
    %v354 = vld [vmem:[#allocation5 + $0x1c] sm:$0xf]
    %v355 = vld [vmem:[#allocation5 + $0x20] sm:$0xf]
    %v356 = vld [vmem:[#allocation5 + $0x24] sm:$0xf]
    %v357 = vld [vmem:[#allocation5 + $0x28] sm:$0xf]
    %v358 = vld [vmem:[#allocation5 + $0x2c] sm:$0xf]
    %v359 = vld [vmem:[#allocation5 + $0x30] sm:$0xf]
    %v360 = vld [vmem:[#allocation5 + $0x34] sm:$0xf]
    %v361 = vld [vmem:[#allocation5 + $0x38] sm:$0xf]
    %v362 = vld [vmem:[#allocation5 + $0x3c] sm:$0xf]
    %v363 = vld [vmem:[%s8] sm:$0x1]
    %v365 = vperm.slane %v363, 0
    %v383 = vunpack.c.l.b16 %v347
    %v384 = vunpack.c.l.b16 %v348
    %v385 = vunpack.c.l.b16 %v349
    %v386 = vunpack.c.l.b16 %v350
    %v387 = vunpack.c.l.b16 %v351
    %v388 = vunpack.c.l.b16 %v352
    %v389 = vunpack.c.l.b16 %v353
    %v390 = vunpack.c.l.b16 %v354
    %v391 = vunpack.c.l.b16 %v355
    %v392 = vunpack.c.l.b16 %v356
    %v393 = vunpack.c.l.b16 %v357
    %v394 = vunpack.c.l.b16 %v358
    %v395 = vunpack.c.l.b16 %v359
    %v396 = vunpack.c.l.b16 %v360
    %v397 = vunpack.c.l.b16 %v361
    %v398 = vunpack.c.l.b16 %v362
    %v399 = vpack.c.b16 %v384, %v383
    %v400 = vpack.c.b16 %v386, %v385
    %v401 = vpack.c.b16 %v388, %v387
    %v402 = vpack.c.b16 %v390, %v389
    %v403 = vpack.c.b16 %v392, %v391
    %v404 = vpack.c.b16 %v394, %v393
    %v405 = vpack.c.b16 %v396, %v395
    %v406 = vpack.c.b16 %v398, %v397
    %415 = vmatpush.bf16.msra.mxu0 %v406
    %416 = vmatpush.bf16.msra.mxu0 %v405
    %417 = vmatpush.bf16.msra.mxu0 %v404
    %418 = vmatpush.bf16.msra.mxu0 %v403
    %419 = vmatpush.bf16.msra.mxu0 %v402
    %420 = vmatpush.bf16.msra.mxu0 %v401
    %421 = vmatpush.bf16.msra.mxu0 %v400
    %422 = vmatpush.bf16.msra.mxu0 %v399
    %423 = vmatmul.bf16.gmra.mxu0 %v345
    %v424 = vpop.f32.mrf.mxu0
    %v425 = vadd.f32 %v365, %v424
    %v426 = vpop.f32.mrf.mxu0
    %v427 = vadd.f32 %v365, %v426
    %428 = vmatmul.bf16.gmra.mxu0 %v346
    %v429 = vpop.f32.mrf.mxu0
    %v430 = vadd.f32 %v365, %v429
    %v431 = vpop.f32.mrf.mxu0
    %432 = vdwg.mxu0
    %vm433 = vcmp.ge.f32.partialorder %v425, 0.0
    %vm434 = vcmp.ge.f32.partialorder %v427, 0.0
    %vm435 = vcmp.ge.f32.partialorder %v430, 0.0
    %v436 = vmul.f32 %v425, 0.1
    %v437 = vmul.f32 %v427, 0.1
    %v438 = vmul.f32 %v430, 0.1
    %v439 = vsel %vm433, %v425, %v436
    %v440 = vsel %vm434, %v427, %v437
    %v441 = vsel %vm435, %v430, %v438
    %442 = vst [vmem:[#allocation7] sm:$0xff] %v439
    %443 = vst [vmem:[#allocation7 + $0x8] sm:$0xff] %v440
    %444 = vst [vmem:[#allocation7 + $0x10] sm:$0xff] %v441
    // Predicated region
    $region46: #{_mlp_forward_impl.1} parent=1 // pred_check
      _
    $region47: #{_mlp_forward_impl.1} parent=1 // pred_check_branch
      %446 = sbr.rel (0) target = $region49
    $region48: #{_mlp_forward_impl.1} parent=1 // pred_region
      %448 = vsyncadd [#allocation4], 0
      %s449 = sshll.u32 [#allocation7], 4
      %s450 = int_to_ptr.vmem [resolvable:$true] %s449
      %s451 = sshll.u32 %s9, 4
      %s452 = int_to_ptr.hbm [resolvable:$true] %s451
      %457 = dma.vmem_to_hbm [thread:$0]  %s450, 384, %s452, [#allocation4], 128, 128, 8
    $region49: #{_mlp_forward_impl.1} parent=1 // pred_fallthru
      _
    // Predicated region
    $region50: #{_mlp_forward_impl.1} parent=1 // pred_check
      _
    $region51: #{_mlp_forward_impl.1} parent=1 // pred_check_branch
      %459 = sbr.rel (0) target = $region53
    $region52: #{_mlp_forward_impl.1} parent=1 // pred_region
      %461 = dma.done [#allocation4], 384
    $region53: #{_mlp_forward_impl.1} parent=1 // pred_fallthru
      _
    %462 = vsyncpa [#allocation3], 1
    %463 = vsyncpa [#allocation6], 1
    %464 = vsyncpa [#allocation4], 1

// kernel: _mlp_forward_impl.1
$region0: #{_mlp_forward_impl.1}
  #allocation0 [shape = 'u32[]', space=smem, size = 0x4, offset = 0x4, fixed_abs, tag = 'smem constant byte address 0x4 - core index']
  #allocation1 [shape = 'u32[72,128]{1,0:T(1,128)}', space=vmem, size = 0x9000, scoped, tag = 'internal scratch']
  %s0 = inlined_call_operand.vmem [shape: f32[24,128], index: 0, kind: input, shape index: {}]
  %s1 = inlined_call_operand.vmem [shape: f32[1,128], index: 1, kind: input, shape index: {}]
  %s2 = inlined_call_operand.vmem [shape: f32[1,128], index: 2, kind: input, shape index: {}]
  %s3 = inlined_call_operand.vmem [shape: bf16[128,128], index: 3, kind: input, shape index: {}]
  %s4 = inlined_call_operand.vmem [shape: f32[1,128], index: 4, kind: input, shape index: {}]
  %s5 = inlined_call_operand.hbm [shape: bf16[128,128], index: 5, kind: input, shape index: {}]
  %s6 = inlined_call_operand.vmem [shape: f32[1,128], index: 6, kind: input, shape index: {}]
  %s7 = inlined_call_operand.hbm [shape: bf16[128,128], index: 7, kind: input, shape index: {}]
  %s8 = inlined_call_operand.vmem [shape: f32[1,128], index: 8, kind: input, shape index: {}]
  %s9 = inlined_call_operand.hbm [shape: f32[24,128], index: 9, kind: output, shape index: {}]
  %s10 = sld [smem:[#allocation0]]
  $region54: #{_mlp_forward_impl.1} parent=0
    _
  %s12 = ssub.s32 1, %s10
  %s13 = scalar_select 0, %s12, %s10
  $region1: #{_mlp_forward_impl.1} parent=0
    #allocation2 [shape = 'u8[32768]{0}', space=vmem, size = 0x8000, scoped, tag = 'input window, operand 5, single buffered']
    #allocation3 [shape = 's32[1]{0}', space=sflag, size = 0x4, scoped, tag = 'scoped memory for _mlp_forward_impl.1']
    #allocation4 [shape = 's32[1]{0}', space=sflag, size = 0x4, scoped, tag = 'scoped memory for _mlp_forward_impl.1']
    #allocation5 [shape = 'u8[32768]{0}', space=vmem, size = 0x8000, scoped, tag = 'input window, operand 7, single buffered']
    #allocation6 [shape = 's32[1]{0}', space=sflag, size = 0x4, scoped, tag = 'scoped memory for _mlp_forward_impl.1']
    #allocation7 [shape = 'u8[12288]{0}', space=vmem, size = 0x3000, scoped, tag = 'output window, operand 0, single buffered']
    %14 = vsyncpa [#allocation3], 0
    %15 = vsyncpa [#allocation6], 0
    %16 = vsyncpa [#allocation4], 0
    // Predicated region
    $region2: #{_mlp_forward_impl.1} parent=1 // pred_check
      _
    $region3: #{_mlp_forward_impl.1} parent=1 // pred_check_branch
      %18 = sbr.rel (0) target = $region5
    $region4: #{_mlp_forward_impl.1} parent=1 // pred_region
      _
    $region5: #{_mlp_forward_impl.1} parent=1 // pred_fallthru
      _
    // Predicated region
    $region6: #{_mlp_forward_impl.1} parent=1 // pred_check
      _
    $region7: #{_mlp_forward_impl.1} parent=1 // pred_check_branch
      %20 = sbr.rel (0) target = $region9
    $region8: #{_mlp_forward_impl.1} parent=1 // pred_region
      _
    $region9: #{_mlp_forward_impl.1} parent=1 // pred_fallthru
      _
    // Predicated region
    $region10: #{_mlp_forward_impl.1} parent=1 // pred_check
      _
    $region11: #{_mlp_forward_impl.1} parent=1 // pred_check_branch
      %22 = sbr.rel (0) target = $region13
    $region12: #{_mlp_forward_impl.1} parent=1 // pred_region
      _
    $region13: #{_mlp_forward_impl.1} parent=1 // pred_fallthru
      _
    // Predicated region
    $region14: #{_mlp_forward_impl.1} parent=1 // pred_check
      _
    $region15: #{_mlp_forward_impl.1} parent=1 // pred_check_branch
      %24 = sbr.rel (0) target = $region17
    $region16: #{_mlp_forward_impl.1} parent=1 // pred_region
      _
    $region17: #{_mlp_forward_impl.1} parent=1 // pred_fallthru
      _
    // Predicated region
    $region18: #{_mlp_forward_impl.1} parent=1 // pred_check
      _
    $region19: #{_mlp_forward_impl.1} parent=1 // pred_check_branch
      %26 = sbr.rel (0) target = $region21
    $region20: #{_mlp_forward_impl.1} parent=1 // pred_region
      _
    $region21: #{_mlp_forward_impl.1} parent=1 // pred_fallthru
      _
    // Predicated region
    $region22: #{_mlp_forward_impl.1} parent=1 // pred_check
      _
    $region23: #{_mlp_forward_impl.1} parent=1 // pred_check_branch
      %28 = sbr.rel (0) target = $region25
    $region24: #{_mlp_forward_impl.1} parent=1 // pred_region
      %30 = vsyncadd [#allocation3], 0
      %s31 = sshll.u32 %s5, 4
      %s32 = int_to_ptr.hbm [resolvable:$true] %s31
      %s33 = sshll.u32 [#allocation2], 4
      %s34 = int_to_ptr.vmem [resolvable:$true] %s33
      %39 = dma.hbm_to_vmem [thread:$0]  %s32, 1024, %s34, [#allocation3], 64, 64, 4
    $region25: #{_mlp_forward_impl.1} parent=1 // pred_fallthru
      _
    // Predicated region
    $region26: #{_mlp_forward_impl.1} parent=1 // pred_check
      _
    $region27: #{_mlp_forward_impl.1} parent=1 // pred_check_branch
      %41 = sbr.rel (0) target = $region29
    $region28: #{_mlp_forward_impl.1} parent=1 // pred_region
      _
    $region29: #{_mlp_forward_impl.1} parent=1 // pred_fallthru
      _
    // Predicated region
    $region30: #{_mlp_forward_impl.1} parent=1 // pred_check
      _
    $region31: #{_mlp_forward_impl.1} parent=1 // pred_check_branch
      %43 = sbr.rel (0) target = $region33
    $region32: #{_mlp_forward_impl.1} parent=1 // pred_region
      %45 = vsyncadd [#allocation6], 0
      %s46 = sshll.u32 %s7, 4
      %s47 = int_to_ptr.hbm [resolvable:$true] %s46
      %s48 = sshll.u32 [#allocation5], 4
      %s49 = int_to_ptr.vmem [resolvable:$true] %s48
      %54 = dma.hbm_to_vmem [thread:$0]  %s47, 1024, %s49, [#allocation6], 64, 64, 4
    $region33: #{_mlp_forward_impl.1} parent=1 // pred_fallthru
      _
    // Predicated region
    $region34: #{_mlp_forward_impl.1} parent=1 // pred_check
      _
    $region35: #{_mlp_forward_impl.1} parent=1 // pred_check_branch
      %56 = sbr.rel (0) target = $region37
    $region36: #{_mlp_forward_impl.1} parent=1 // pred_region
      _
    $region37: #{_mlp_forward_impl.1} parent=1 // pred_fallthru
      _
    // Predicated region
    $region38: #{_mlp_forward_impl.1} parent=1 // pred_check
      _
    $region39: #{_mlp_forward_impl.1} parent=1 // pred_check_branch
      %58 = sbr.rel (0) target = $region41
    $region40: #{_mlp_forward_impl.1} parent=1 // pred_region
      %60 = dma.done [#allocation3], 1024
    $region41: #{_mlp_forward_impl.1} parent=1 // pred_fallthru
      _
    // Predicated region
    $region42: #{_mlp_forward_impl.1} parent=1 // pred_check
      _
    $region43: #{_mlp_forward_impl.1} parent=1 // pred_check_branch
      %62 = sbr.rel (0) target = $region45
    $region44: #{_mlp_forward_impl.1} parent=1 // pred_region
      %64 = dma.done [#allocation6], 1024
    $region45: #{_mlp_forward_impl.1} parent=1 // pred_fallthru
      _
    %v65 = vld [vmem:[%s0] sm:$0xff]
    %v66 = vld [vmem:[%s0 + $0x8] sm:$0xff]
    %v67 = vld [vmem:[%s0 + $0x10] sm:$0xff]
    %68 = vadd.xlane.f32.xlu0 %v65
    %v69 = vpop.xlane.xlu0 %68
    %70 = vadd.xlane.f32.xlu0 %v66
    %v71 = vpop.xlane.xlu0 %70
    %72 = vadd.xlane.f32.xlu0 %v67
    %v73 = vpop.xlane.xlu0 %72
    %v74 = vmul.f32 %v65, %v65
    %v75 = vmul.f32 %v66, %v66
    %v76 = vmul.f32 %v67, %v67
    %77 = vadd.xlane.f32.xlu0 %v74
    %v78 = vpop.xlane.xlu0 %77
    %79 = vadd.xlane.f32.xlu0 %v75
    %v80 = vpop.xlane.xlu0 %79
    %81 = vadd.xlane.f32.xlu0 %v76
    %v82 = vpop.xlane.xlu0 %81
    %v83 = vmul.f32 %v69, 0.0625
    %v84 = vmul.f32 %v71, 0.0625
    %v85 = vmul.f32 %v73, 0.0625
    %v86 = vmul.f32 %v78, 0.0625
    %v87 = vmul.f32 %v80, 0.0625
    %v88 = vmul.f32 %v82, 0.0625
    %v89 = vmul.f32 %v83, %v83
    %v90 = vmul.f32 %v84, %v84
    %v91 = vmul.f32 %v85, %v85
    %v92 = vsub.f32 %v86, %v89
    %v93 = vsub.f32 %v87, %v90
    %v94 = vsub.f32 %v88, %v91
    %v95 = vmax.f32 %v92, 0.0
    %v96 = vmax.f32 %v93, 0.0
    %v97 = vmax.f32 %v94, 0.0
    %v98 = vsub.f32 %v65, %v83
    %v99 = vsub.f32 %v66, %v84
    %v100 = vsub.f32 %v67, %v85
    %v101 = vadd.f32 %v95, 1e-05
    %v102 = vadd.f32 %v96, 1e-05
    %v103 = vadd.f32 %v97, 1e-05
    %v104 = vrsqrt.pop %v101
    %v105 = vmul.f32 %v104, %v101
    %v106 = vmul.f32 %v105, %v104
    %v107 = vmul.f32 0.5, %v106
    %v108 = vsub.f32 1.5, %v107
    %v109 = vmul.f32 %v104, %v108
    %vm110 = vweird.f32 %v101
    %vm111 = vweird.f32 %v104
    %vm112 = vmor %vm110, %vm111
    %v113 = vsel %vm112, %v104, %v109
    %v114 = vrsqrt.pop %v102
    %v115 = vmul.f32 %v114, %v102
    %v116 = vmul.f32 %v115, %v114
    %v117 = vmul.f32 0.5, %v116
    %v118 = vsub.f32 1.5, %v117
    %v119 = vmul.f32 %v114, %v118
    %vm120 = vweird.f32 %v102
    %vm121 = vweird.f32 %v114
    %vm122 = vmor %vm120, %vm121
    %v123 = vsel %vm122, %v114, %v119
    %v124 = vrsqrt.pop %v103
    %v125 = vmul.f32 %v124, %v103
    %v126 = vmul.f32 %v125, %v124
    %v127 = vmul.f32 0.5, %v126
    %v128 = vsub.f32 1.5, %v127
    %v129 = vmul.f32 %v124, %v128
    %vm130 = vweird.f32 %v103
    %vm131 = vweird.f32 %v124
    %vm132 = vmor %vm130, %vm131
    %v133 = vsel %vm132, %v124, %v129
    %v134 = vmul.f32 %v98, %v113
    %v135 = vmul.f32 %v99, %v123
    %v136 = vmul.f32 %v100, %v133
    %v137 = vld [vmem:[%s1] sm:$0x1]
    %v139 = vperm.slane %v137, 0
    %v141 = vmul.f32 %v134, %v139
    %v142 = vmul.f32 %v135, %v139
    %v143 = vmul.f32 %v136, %v139
    %v144 = vld [vmem:[%s2] sm:$0x1]
    %v146 = vperm.slane %v144, 0
    %v148 = vadd.f32 %v141, %v146
    %v149 = vadd.f32 %v142, %v146
    %v150 = vadd.f32 %v143, %v146
    %v151 = vpack.c.bf16 %v149, %v148
    %v152 = vpack.c.bf16 %v150, %v150
    %v153 = vld [vmem:[%s3] sm:$0xf]
    %v154 = vld [vmem:[%s3 + $0x4] sm:$0xf]
    %v155 = vld [vmem:[%s3 + $0x8] sm:$0xf]
    %v156 = vld [vmem:[%s3 + $0xc] sm:$0xf]
    %v157 = vld [vmem:[%s3 + $0x10] sm:$0xf]
    %v158 = vld [vmem:[%s3 + $0x14] sm:$0xf]
    %v159 = vld [vmem:[%s3 + $0x18] sm:$0xf]
    %v160 = vld [vmem:[%s3 + $0x1c] sm:$0xf]
    %v161 = vld [vmem:[%s3 + $0x20] sm:$0xf]
    %v162 = vld [vmem:[%s3 + $0x24] sm:$0xf]
    %v163 = vld [vmem:[%s3 + $0x28] sm:$0xf]
    %v164 = vld [vmem:[%s3 + $0x2c] sm:$0xf]
    %v165 = vld [vmem:[%s3 + $0x30] sm:$0xf]
    %v166 = vld [vmem:[%s3 + $0x34] sm:$0xf]
    %v167 = vld [vmem:[%s3 + $0x38] sm:$0xf]
    %v168 = vld [vmem:[%s3 + $0x3c] sm:$0xf]
    %v169 = vld [vmem:[%s4] sm:$0x1]
    %v171 = vperm.slane %v169, 0
    %v189 = vunpack.c.l.b16 %v153
    %v190 = vunpack.c.l.b16 %v154
    %v191 = vunpack.c.l.b16 %v155
    %v192 = vunpack.c.l.b16 %v156
    %v193 = vunpack.c.l.b16 %v157
    %v194 = vunpack.c.l.b16 %v158
    %v195 = vunpack.c.l.b16 %v159
    %v196 = vunpack.c.l.b16 %v160
    %v197 = vunpack.c.l.b16 %v161
    %v198 = vunpack.c.l.b16 %v162
    %v199 = vunpack.c.l.b16 %v163
    %v200 = vunpack.c.l.b16 %v164
    %v201 = vunpack.c.l.b16 %v165
    %v202 = vunpack.c.l.b16 %v166
    %v203 = vunpack.c.l.b16 %v167
    %v204 = vunpack.c.l.b16 %v168
    %v205 = vpack.c.b16 %v190, %v189
    %v206 = vpack.c.b16 %v192, %v191
    %v207 = vpack.c.b16 %v194, %v193
    %v208 = vpack.c.b16 %v196, %v195
    %v209 = vpack.c.b16 %v198, %v197
    %v210 = vpack.c.b16 %v200, %v199
    %v211 = vpack.c.b16 %v202, %v201
    %v212 = vpack.c.b16 %v204, %v203
    %221 = vmatpush.bf16.msra.mxu0 %v212
    %222 = vmatpush.bf16.msra.mxu0 %v211
    %223 = vmatpush.bf16.msra.mxu0 %v210
    %224 = vmatpush.bf16.msra.mxu0 %v209
    %225 = vmatpush.bf16.msra.mxu0 %v208
    %226 = vmatpush.bf16.msra.mxu0 %v207
    %227 = vmatpush.bf16.msra.mxu0 %v206
    %228 = vmatpush.bf16.msra.mxu0 %v205
    %229 = vmatmul.bf16.gmra.mxu0 %v151
    %v230 = vpop.f32.mrf.mxu0
    %v231 = vadd.f32 %v171, %v230
    %v232 = vpop.f32.mrf.mxu0
    %v233 = vadd.f32 %v171, %v232
    %234 = vmatmul.bf16.gmra.mxu0 %v152
    %v235 = vpop.f32.mrf.mxu0
    %v236 = vadd.f32 %v171, %v235
    %v237 = vpop.f32.mrf.mxu0
    %238 = vdwg.mxu0
    %vm239 = vcmp.ge.f32.partialorder %v231, 0.0
    %vm240 = vcmp.ge.f32.partialorder %v233, 0.0
    %vm241 = vcmp.ge.f32.partialorder %v236, 0.0
    %v242 = vmul.f32 %v231, 0.1
    %v243 = vmul.f32 %v233, 0.1
    %v244 = vmul.f32 %v236, 0.1
    %v245 = vsel %vm239, %v231, %v242
    %v246 = vsel %vm240, %v233, %v243
    %v247 = vsel %vm241, %v236, %v244
    %v248 = vpack.c.bf16 %v246, %v245
    %v249 = vpack.c.bf16 %v247, %v247
    %v250 = vld [vmem:[#allocation2] sm:$0xf]
    %v251 = vld [vmem:[#allocation2 + $0x4] sm:$0xf]
    %v252 = vld [vmem:[#allocation2 + $0x8] sm:$0xf]
    %v253 = vld [vmem:[#allocation2 + $0xc] sm:$0xf]
    %v254 = vld [vmem:[#allocation2 + $0x10] sm:$0xf]
    %v255 = vld [vmem:[#allocation2 + $0x14] sm:$0xf]
    %v256 = vld [vmem:[#allocation2 + $0x18] sm:$0xf]
    %v257 = vld [vmem:[#allocation2 + $0x1c] sm:$0xf]
    %v258 = vld [vmem:[#allocation2 + $0x20] sm:$0xf]
    %v259 = vld [vmem:[#allocation2 + $0x24] sm:$0xf]
    %v260 = vld [vmem:[#allocation2 + $0x28] sm:$0xf]
    %v261 = vld [vmem:[#allocation2 + $0x2c] sm:$0xf]
    %v262 = vld [vmem:[#allocation2 + $0x30] sm:$0xf]
    %v263 = vld [vmem:[#allocation2 + $0x34] sm:$0xf]
    %v264 = vld [vmem:[#allocation2 + $0x38] sm:$0xf]
    %v265 = vld [vmem:[#allocation2 + $0x3c] sm:$0xf]
    %v266 = vld [vmem:[%s6] sm:$0x1]
    %v268 = vperm.slane %v266, 0
    %v286 = vunpack.c.l.b16 %v250
    %v287 = vunpack.c.l.b16 %v251
    %v288 = vunpack.c.l.b16 %v252
    %v289 = vunpack.c.l.b16 %v253
    %v290 = vunpack.c.l.b16 %v254
    %v291 = vunpack.c.l.b16 %v255
    %v292 = vunpack.c.l.b16 %v256
    %v293 = vunpack.c.l.b16 %v257
    %v294 = vunpack.c.l.b16 %v258
    %v295 = vunpack.c.l.b16 %v259
    %v296 = vunpack.c.l.b16 %v260
    %v297 = vunpack.c.l.b16 %v261
    %v298 = vunpack.c.l.b16 %v262
    %v299 = vunpack.c.l.b16 %v263
    %v300 = vunpack.c.l.b16 %v264
    %v301 = vunpack.c.l.b16 %v265
    %v302 = vpack.c.b16 %v287, %v286
    %v303 = vpack.c.b16 %v289, %v288
    %v304 = vpack.c.b16 %v291, %v290
    %v305 = vpack.c.b16 %v293, %v292
    %v306 = vpack.c.b16 %v295, %v294
    %v307 = vpack.c.b16 %v297, %v296
    %v308 = vpack.c.b16 %v299, %v298
    %v309 = vpack.c.b16 %v301, %v300
    %318 = vmatpush.bf16.msra.mxu0 %v309
    %319 = vmatpush.bf16.msra.mxu0 %v308
    %320 = vmatpush.bf16.msra.mxu0 %v307
    %321 = vmatpush.bf16.msra.mxu0 %v306
    %322 = vmatpush.bf16.msra.mxu0 %v305
    %323 = vmatpush.bf16.msra.mxu0 %v304
    %324 = vmatpush.bf16.msra.mxu0 %v303
    %325 = vmatpush.bf16.msra.mxu0 %v302
    %326 = vmatmul.bf16.gmra.mxu0 %v248
    %v327 = vpop.f32.mrf.mxu0
    %v328 = vadd.f32 %v268, %v327
    %v329 = vpop.f32.mrf.mxu0
    %v330 = vadd.f32 %v268, %v329
    %331 = vmatmul.bf16.gmra.mxu0 %v249
    %v332 = vpop.f32.mrf.mxu0
    %v333 = vadd.f32 %v268, %v332
    %v334 = vpop.f32.mrf.mxu0
    %335 = vdwg.mxu0
    %vm336 = vcmp.ge.f32.partialorder %v328, 0.0
    %vm337 = vcmp.ge.f32.partialorder %v330, 0.0
    %vm338 = vcmp.ge.f32.partialorder %v333, 0.0
    %v339 = vmul.f32 %v328, 0.1
    %v340 = vmul.f32 %v330, 0.1
    %v341 = vmul.f32 %v333, 0.1
    %v342 = vsel %vm336, %v328, %v339
    %v343 = vsel %vm337, %v330, %v340
    %v344 = vsel %vm338, %v333, %v341
    %v345 = vpack.c.bf16 %v343, %v342
    %v346 = vpack.c.bf16 %v344, %v344
    %v347 = vld [vmem:[#allocation5] sm:$0xf]
    %v348 = vld [vmem:[#allocation5 + $0x4] sm:$0xf]
    %v349 = vld [vmem:[#allocation5 + $0x8] sm:$0xf]
    %v350 = vld [vmem:[#allocation5 + $0xc] sm:$0xf]
    %v351 = vld [vmem:[#allocation5 + $0x10] sm:$0xf]
    %v352 = vld [vmem:[#allocation5 + $0x14] sm:$0xf]
    %v353 = vld [vmem:[#allocation5 + $0x18] sm:$0xf]
    %v354 = vld [vmem:[#allocation5 + $0x1c] sm:$0xf]
    %v355 = vld [vmem:[#allocation5 + $0x20] sm:$0xf]
    %v356 = vld [vmem:[#allocation5 + $0x24] sm:$0xf]
    %v357 = vld [vmem:[#allocation5 + $0x28] sm:$0xf]
    %v358 = vld [vmem:[#allocation5 + $0x2c] sm:$0xf]
    %v359 = vld [vmem:[#allocation5 + $0x30] sm:$0xf]
    %v360 = vld [vmem:[#allocation5 + $0x34] sm:$0xf]
    %v361 = vld [vmem:[#allocation5 + $0x38] sm:$0xf]
    %v362 = vld [vmem:[#allocation5 + $0x3c] sm:$0xf]
    %v363 = vld [vmem:[%s8] sm:$0x1]
    %v365 = vperm.slane %v363, 0
    %v383 = vunpack.c.l.b16 %v347
    %v384 = vunpack.c.l.b16 %v348
    %v385 = vunpack.c.l.b16 %v349
    %v386 = vunpack.c.l.b16 %v350
    %v387 = vunpack.c.l.b16 %v351
    %v388 = vunpack.c.l.b16 %v352
    %v389 = vunpack.c.l.b16 %v353
    %v390 = vunpack.c.l.b16 %v354
    %v391 = vunpack.c.l.b16 %v355
    %v392 = vunpack.c.l.b16 %v356
    %v393 = vunpack.c.l.b16 %v357
    %v394 = vunpack.c.l.b16 %v358
    %v395 = vunpack.c.l.b16 %v359
    %v396 = vunpack.c.l.b16 %v360
    %v397 = vunpack.c.l.b16 %v361
    %v398 = vunpack.c.l.b16 %v362
    %v399 = vpack.c.b16 %v384, %v383
    %v400 = vpack.c.b16 %v386, %v385
    %v401 = vpack.c.b16 %v388, %v387
    %v402 = vpack.c.b16 %v390, %v389
    %v403 = vpack.c.b16 %v392, %v391
    %v404 = vpack.c.b16 %v394, %v393
    %v405 = vpack.c.b16 %v396, %v395
    %v406 = vpack.c.b16 %v398, %v397
    %415 = vmatpush.bf16.msra.mxu0 %v406
    %416 = vmatpush.bf16.msra.mxu0 %v405
    %417 = vmatpush.bf16.msra.mxu0 %v404
    %418 = vmatpush.bf16.msra.mxu0 %v403
    %419 = vmatpush.bf16.msra.mxu0 %v402
    %420 = vmatpush.bf16.msra.mxu0 %v401
    %421 = vmatpush.bf16.msra.mxu0 %v400
    %422 = vmatpush.bf16.msra.mxu0 %v399
    %423 = vmatmul.bf16.gmra.mxu0 %v345
    %v424 = vpop.f32.mrf.mxu0
    %v425 = vadd.f32 %v365, %v424
    %v426 = vpop.f32.mrf.mxu0
    %v427 = vadd.f32 %v365, %v426
    %428 = vmatmul.bf16.gmra.mxu0 %v346
    %v429 = vpop.f32.mrf.mxu0
    %v430 = vadd.f32 %v365, %v429
    %v431 = vpop.f32.mrf.mxu0
    %432 = vdwg.mxu0
    %vm433 = vcmp.ge.f32.partialorder %v425, 0.0
    %vm434 = vcmp.ge.f32.partialorder %v427, 0.0
    %vm435 = vcmp.ge.f32.partialorder %v430, 0.0
    %v436 = vmul.f32 %v425, 0.1
    %v437 = vmul.f32 %v427, 0.1
    %v438 = vmul.f32 %v430, 0.1
    %v439 = vsel %vm433, %v425, %v436
    %v440 = vsel %vm434, %v427, %v437
    %v441 = vsel %vm435, %v430, %v438
    %442 = vst [vmem:[#allocation7] sm:$0xff] %v439
    %443 = vst [vmem:[#allocation7 + $0x8] sm:$0xff] %v440
    %444 = vst [vmem:[#allocation7 + $0x10] sm:$0xff] %v441
    // Predicated region
    $region46: #{_mlp_forward_impl.1} parent=1 // pred_check
      _
    $region47: #{_mlp_forward_impl.1} parent=1 // pred_check_branch
      %446 = sbr.rel (0) target = $region49
    $region48: #{_mlp_forward_impl.1} parent=1 // pred_region
      %448 = vsyncadd [#allocation4], 0
      %s449 = sshll.u32 [#allocation7], 4
      %s450 = int_to_ptr.vmem [resolvable:$true] %s449
      %s451 = sshll.u32 %s9, 4
      %s452 = int_to_ptr.hbm [resolvable:$true] %s451
      %457 = dma.vmem_to_hbm [thread:$0]  %s450, 384, %s452, [#allocation4], 128, 128, 8
    $region49: #{_mlp_forward_impl.1} parent=1 // pred_fallthru
      _
    // Predicated region
    $region50: #{_mlp_forward_impl.1} parent=1 // pred_check
      _
    $region51: #{_mlp_forward_impl.1} parent=1 // pred_check_branch
      %459 = sbr.rel (0) target = $region53
    $region52: #{_mlp_forward_impl.1} parent=1 // pred_region
      %461 = dma.done [#allocation4], 384
    $region53: #{_mlp_forward_impl.1} parent=1 // pred_fallthru
      _
    %462 = vsyncpa [#allocation3], 1
    %463 = vsyncpa [#allocation6], 1
    %464 = vsyncpa [#allocation4], 1

</llo_original>
